<compile_context>
chip_gen: v6e
topology: v6e:2x2x1
jax: 0.10.0
libtpu: 0.0.40
codegen_flags: <defaults>
</compile_context>

<pallas_src>
import functools

import jax
import jax.numpy as jnp
from jax.experimental import pallas as pl
from jax.experimental.pallas import tpu as pltpu


# -----------------------------------------------------------------------------
# Tiled linear (x @ w + b) Pallas kernel
# -----------------------------------------------------------------------------
def _linear_kernel(x_ref, w_ref, b_ref, o_ref, acc_ref):
    k = pl.program_id(2)

    @pl.when(k == 0)
    def _():
        acc_ref[...] = jnp.zeros_like(acc_ref)

    acc_ref[...] += jnp.dot(
        x_ref[...], w_ref[...], preferred_element_type=jnp.float32
    )

    @pl.when(k == pl.num_programs(2) - 1)
    def _():
        o_ref[...] = acc_ref[...] + b_ref[...]


def _round_up(x, m):
    return ((x + m - 1) // m) * m


def pallas_linear(x, w, b, *, tm=256, tn=256, tk=512,
                  compute_dtype=jnp.bfloat16):
    """out = x @ w + b.

    x: (M, K) f32, w: (K, N) f32, b: (N,) f32  ->  (M, N) f32.
    Operands are padded to sublane/lane-aligned shapes (zeros in K are exact),
    cast to `compute_dtype` for the MXU, accumulated in f32 VMEM scratch.
    """
    x = x.astype(jnp.float32)
    w = w.astype(jnp.float32)
    M, K = x.shape
    N = w.shape[1]

    # Clamp tiles to the (aligned) problem size; keep (8, 128) granularity.
    tm = min(tm, _round_up(M, 8))
    tk = min(tk, _round_up(K, 128))
    tn = min(tn, _round_up(N, 128))
    Mp, Kp, Np = _round_up(M, tm), _round_up(K, tk), _round_up(N, tn)

    xp = jnp.pad(x, ((0, Mp - M), (0, Kp - K))).astype(compute_dtype)
    wp = jnp.pad(w, ((0, Kp - K), (0, Np - N))).astype(compute_dtype)
    bp = jnp.pad(b.astype(jnp.float32), (0, Np - N)).reshape(1, Np)

    grid = (Mp // tm, Np // tn, Kp // tk)

    out = pl.pallas_call(
        _linear_kernel,
        grid=grid,
        out_shape=jax.ShapeDtypeStruct((Mp, Np), jnp.float32),
        in_specs=[
            pl.BlockSpec((tm, tk), lambda i, j, k: (i, k)),
            pl.BlockSpec((tk, tn), lambda i, j, k: (k, j)),
            pl.BlockSpec((1, tn), lambda i, j, k: (0, j)),
        ],
        out_specs=pl.BlockSpec((tm, tn), lambda i, j, k: (i, j)),
        scratch_shapes=[pltpu.VMEM((tm, tn), jnp.float32)],
        compiler_params=pltpu.CompilerParams(
            dimension_semantics=("parallel", "parallel", "arbitrary")),
    )(xp, wp, bp)

    return out[:M, :N]


# -----------------------------------------------------------------------------
# CodeEmbed forward
# -----------------------------------------------------------------------------
def code_embed_forward(params, code, *, compute_dtype=jnp.bfloat16):
    """CodeEmbed.forward: code (B, T, V) -> (B, T, latent).

    Identity used (exact algebra, just a different summation order):
        out[b,t,:] = ((code[b,t,:,None] * embed).reshape(V*E)) @ fc_w + fc_b
                   = code[b,t,:] @ W_eff + fc_b
        with W_eff[v,:] = sum_e embed[v,e] * fc_w[v*E + e, :]
    The weight fold is a one-time O(V*E*latent) transform done in plain JAX;
    the hot (B*T, V) @ (V, latent) matmul runs in the tiled Pallas kernel.
    """
    embed = params["embed"].astype(jnp.float32)      # (V, E)
    fc_w = params["fc_w"].astype(jnp.float32)        # (V*E, latent)
    fc_b = params["fc_b"].astype(jnp.float32)        # (latent,)
    V, E = embed.shape
    L = fc_w.shape[1]

    w_eff = jnp.einsum("ve,vel->vl", embed, fc_w.reshape(V, E, L))  # (V, L)

    B, T, _ = code.shape
    out = pallas_linear(code.reshape(B * T, V).astype(jnp.float32),
                        w_eff, fc_b, compute_dtype=compute_dtype)
    return out.reshape(B, T, L)


def code_embed_reference(params, code):
    """Pure-JAX f32 reference matching the PyTorch forward literally."""
    code = code.astype(jnp.float32)
    B, T, V = code.shape
    E = params["embed"].shape[1]
    expanded = (code[..., None] * params["embed"][None, None, :, :]).reshape(
        B, T, V * E)
    return expanded @ params["fc_w"] + params["fc_b"]


# -----------------------------------------------------------------------------
# Deterministic parameter construction
# -----------------------------------------------------------------------------
def init_params(key, code_vocab_size, embed_size, latent_size):
    k1, k2, k3 = jax.random.split(key, 3)

    def nrm(k, shape, scale=0.1):
        return (scale * jax.random.normal(k, shape)).astype(jnp.float32)

    return {
        "embed": nrm(k1, (code_vocab_size, embed_size)),
        "fc_w": nrm(k2, (code_vocab_size * embed_size, latent_size)),
        "fc_b": nrm(k3, (latent_size,)),
    }


# -----------------------------------------------------------------------------
if __name__ == "__main__":
    B, T = 2, 8
    code_vocab_size, embed_size, latent_size = 6, 8, 16

    key = jax.random.PRNGKey(0)
    k_par, k_code = jax.random.split(key)
    params = init_params(k_par, code_vocab_size, embed_size, latent_size)

    # binary code/value indicators, like the MIMIC pipeline feeds CodeEmbed
    code = (jax.random.uniform(k_code, (B, T, code_vocab_size)) > 0.5).astype(
        jnp.float32)

    fwd = jax.jit(functools.partial(code_embed_forward, params))
    out = fwd(code)
    jax.block_until_ready(out)

    assert out.shape == (B, T, latent_size)
    ref = code_embed_reference(params, code)
    assert jnp.all(jnp.isfinite(out))
    assert jnp.allclose(out, ref, atol=2e-2, rtol=2e-2), (
        float(jnp.max(jnp.abs(out - ref))))
    print("KERNEL_OK")
</pallas_src>

<mosaic_0001>
module attributes {stable_mosaic.version = 11 : i64} {
  func.func @_linear_kernel(%arg0: i32, %arg1: i32, %arg2: i32, %arg3: memref<16x128xbf16, #tpu.memory_space<vmem>>, %arg4: memref<128x128xbf16, #tpu.memory_space<vmem>>, %arg5: memref<1x128xf32, #tpu.memory_space<vmem>>, %arg6: memref<16x128xf32, #tpu.memory_space<vmem>>, %arg7: memref<16x128xf32, #tpu.memory_space<vmem>>) attributes {dimension_semantics = [#tpu.dimension_semantics<parallel>, #tpu.dimension_semantics<parallel>, #tpu.dimension_semantics<arbitrary>], iteration_bounds = array<i64: 1, 1, 1>, scalar_prefetch = 0 : i64, scratch_operands = 1 : i64, tpu.core_type = #tpu.core_type<tc>, window_params = [{transform_indices = @transform_0, window_bounds = array<i64: 16, 128>}, {transform_indices = @transform_1, window_bounds = array<i64: 128, 128>}, {transform_indices = @transform_2, window_bounds = array<i64: 1, 128>}, {transform_indices = @transform_3, window_bounds = array<i64: 16, 128>}]} {
    %c0_i32 = arith.constant 0 : i32
    %0 = arith.cmpi eq, %arg2, %c0_i32 : i32
    %1 = arith.extui %0 : i1 to i32
    %c0_i32_0 = arith.constant 0 : i32
    %2 = arith.cmpi ne, %1, %c0_i32_0 : i32
    scf.if %2 {
      %cst_10 = arith.constant 0.000000e+00 : f32
      %12 = vector.broadcast %cst_10 : f32 to vector<16x128xf32>
      %c0_11 = arith.constant 0 : index
      %c0_12 = arith.constant 0 : index
      %13 = vector.load %arg7[%c0_11, %c0_12] : memref<16x128xf32, #tpu.memory_space<vmem>>, vector<16x128xf32>
      tpu.vector_store %arg7[%c0_11, %c0_12], %12 {strides = array<i32>} : memref<16x128xf32, #tpu.memory_space<vmem>>, vector<16x128xf32>,
    } else {
    }
    %c0 = arith.constant 0 : index
    %c0_1 = arith.constant 0 : index
    %3 = vector.load %arg7[%c0, %c0_1] : memref<16x128xf32, #tpu.memory_space<vmem>>, vector<16x128xf32>
    %c0_2 = arith.constant 0 : index
    %c0_3 = arith.constant 0 : index
    %4 = vector.load %arg3[%c0_2, %c0_3] : memref<16x128xbf16, #tpu.memory_space<vmem>>, vector<16x128xbf16>
    %c0_4 = arith.constant 0 : index
    %c0_5 = arith.constant 0 : index
    %5 = vector.load %arg4[%c0_4, %c0_5] : memref<128x128xbf16, #tpu.memory_space<vmem>>, vector<128x128xbf16>
    %cst = arith.constant dense<0.000000e+00> : vector<16x128xf32>
    %6 = tpu.matmul %4, %5, %cst {dimension_numbers = #tpu.dot_dimension_numbers<[1], [0], [0], [1], [0, 0, 1, 1], [], []>} : vector<16x128xbf16>, vector<128x128xbf16>, vector<16x128xf32> -> vector<16x128xf32>
    %7 = arith.addf %3, %6 : vector<16x128xf32>
    %c0_6 = arith.constant 0 : index
    %c0_7 = arith.constant 0 : index
    %8 = vector.load %arg7[%c0_6, %c0_7] : memref<16x128xf32, #tpu.memory_space<vmem>>, vector<16x128xf32>
    tpu.vector_store %arg7[%c0_6, %c0_7], %7 {strides = array<i32>} : memref<16x128xf32, #tpu.memory_space<vmem>>, vector<16x128xf32>,
    %c0_i32_8 = arith.constant 0 : i32
    %9 = arith.cmpi eq, %arg2, %c0_i32_8 : i32
    %10 = arith.extui %9 : i1 to i32
    %c0_i32_9 = arith.constant 0 : i32
    %11 = arith.cmpi ne, %10, %c0_i32_9 : i32
    scf.if %11 {
      %c0_10 = arith.constant 0 : index
      %c0_11 = arith.constant 0 : index
      %12 = vector.load %arg7[%c0_10, %c0_11] : memref<16x128xf32, #tpu.memory_space<vmem>>, vector<16x128xf32>
      %c0_12 = arith.constant 0 : index
      %c0_13 = arith.constant 0 : index
      %13 = vector.load %arg5[%c0_12, %c0_13] : memref<1x128xf32, #tpu.memory_space<vmem>>, vector<1x128xf32>
      %14 = vector.broadcast %13 : vector<1x128xf32> to vector<16x128xf32>
      %15 = arith.addf %12, %14 : vector<16x128xf32>
      %c0_14 = arith.constant 0 : index
      %c0_15 = arith.constant 0 : index
      %16 = vector.load %arg6[%c0_14, %c0_15] : memref<16x128xf32, #tpu.memory_space<vmem>>, vector<16x128xf32>
      tpu.vector_store %arg6[%c0_14, %c0_15], %15 {strides = array<i32>} : memref<16x128xf32, #tpu.memory_space<vmem>>, vector<16x128xf32>,
    } else {
    }
    return
  }
  func.func @transform_0(%arg0: i32, %arg1: i32, %arg2: i32) -> (i32, i32) {
    %c0_i32 = arith.constant 0 : i32
    return %arg0, %arg2 : i32, i32
  }
  func.func @transform_1(%arg0: i32, %arg1: i32, %arg2: i32) -> (i32, i32) {
    %c0_i32 = arith.constant 0 : i32
    return %arg2, %arg1 : i32, i32
  }
  func.func @transform_2(%arg0: i32, %arg1: i32, %arg2: i32) -> (i32, i32) {
    %c0_i32 = arith.constant 0 : i32
    %c0_i32_0 = arith.constant 0 : i32
    return %c0_i32, %arg1 : i32, i32
  }
  func.func @transform_3(%arg0: i32, %arg1: i32, %arg2: i32) -> (i32, i32) {
    %c0_i32 = arith.constant 0 : i32
    return %arg0, %arg1 : i32, i32
  }
}

</mosaic_0001>

<llo_original>
// kernel: code_embed_forward.1
$region0: #{code_embed_forward.1}
  #allocation0 [shape = 'u32[]', space=smem, size = 0x4, offset = 0x4, fixed_abs, tag = 'smem constant byte address 0x4 - core index']
  #allocation1 [shape = 'u32[144,128]{1,0:T(1,128)}', space=vmem, size = 0x12000, scoped, tag = 'internal scratch']
  #allocation2 [shape = 'f32[16,128]{1,0:T(8,128)}', space=vmem, size = 0x2000, scoped, tag = 'scratch operand']
  %s0 = inlined_call_operand.vmem [shape: bf16[16,128], index: 0, kind: input, shape index: {}]
  %s1 = inlined_call_operand.hbm [shape: bf16[128,128], index: 1, kind: input, shape index: {}]
  %s2 = inlined_call_operand.vmem [shape: f32[1,128], index: 2, kind: input, shape index: {}]
  %s3 = inlined_call_operand.vmem [shape: f32[16,128], index: 3, kind: output, shape index: {}]
  %s4 = sld [smem:[#allocation0]]
  $region34: #{code_embed_forward.1} parent=0
    _
  %s6 = ssub.s32 1, %s4
  %s7 = scalar_select 0, %s6, %s4
  $region1: #{code_embed_forward.1} parent=0
    #allocation3 [shape = 'u8[32768]{0}', space=vmem, size = 0x8000, scoped, tag = 'input window, operand 1, single buffered']
    #allocation4 [shape = 's32[1]{0}', space=sflag, size = 0x4, scoped, tag = 'scoped memory for code_embed_forward.1']
    %8 = vsyncpa [#allocation4], 0
    // Predicated region
    $region2: #{code_embed_forward.1} parent=1 // pred_check
      _
    $region3: #{code_embed_forward.1} parent=1 // pred_check_branch
      %10 = sbr.rel (0) target = $region5
    $region4: #{code_embed_forward.1} parent=1 // pred_region
      _
    $region5: #{code_embed_forward.1} parent=1 // pred_fallthru
      _
    // Predicated region
    $region6: #{code_embed_forward.1} parent=1 // pred_check
      _
    $region7: #{code_embed_forward.1} parent=1 // pred_check_branch
      %12 = sbr.rel (0) target = $region9
    $region8: #{code_embed_forward.1} parent=1 // pred_region
      %s14 = ssub.s32 1024, 1024
      %15 = vsyncadd [#allocation4], %s14
      %s16 = sshll.u32 [#allocation3], 4
      %s17 = int_to_ptr.vmem [resolvable:$true] %s16
      %22 = dma.hbm_to_vmem [thread:$0]  %s1, 1024, %s17, [#allocation4], 64, 64, 4
    $region9: #{code_embed_forward.1} parent=1 // pred_fallthru
      _
    // Predicated region
    $region10: #{code_embed_forward.1} parent=1 // pred_check
      _
    $region11: #{code_embed_forward.1} parent=1 // pred_check_branch
      %24 = sbr.rel (0) target = $region13
    $region12: #{code_embed_forward.1} parent=1 // pred_region
      _
    $region13: #{code_embed_forward.1} parent=1 // pred_fallthru
      _
    // Predicated region
    $region14: #{code_embed_forward.1} parent=1 // pred_check
      _
    $region15: #{code_embed_forward.1} parent=1 // pred_check_branch
      %26 = sbr.rel (0) target = $region17
    $region16: #{code_embed_forward.1} parent=1 // pred_region
      %27 = dma.done [#allocation4], 1024
    $region17: #{code_embed_forward.1} parent=1 // pred_fallthru
      _
    %p29 = scmp.eq.s32.totalorder 0, 0
    // Predicated region
    $region18: #{code_embed_forward.1} parent=1 // pred_check
      %p30 = pneg %p29
    $region19: #{code_embed_forward.1} parent=1 // pred_check_branch
      %32 = sbr.rel (%p30) target = $region21
    $region20: #{code_embed_forward.1} parent=1 // pred_region
      %33 = vst [vmem:[#allocation2] sm:$0xff] 0.0
      %34 = vst [vmem:[#allocation2 + $0x8] sm:$0xff] 0.0
    $region21: #{code_embed_forward.1} parent=1 // pred_fallthru
      _
    %v35 = vld [vmem:[#allocation2] sm:$0xff]
    %v36 = vld [vmem:[#allocation2 + $0x8] sm:$0xff]
    %v37 = vld [vmem:[%s0] sm:$0xf]
    %v38 = vld [vmem:[%s0 + $0x4] sm:$0xf]
    %v39 = vld [vmem:[#allocation3] sm:$0xf]
    %v40 = vld [vmem:[#allocation3 + $0x4] sm:$0xf]
    %v41 = vld [vmem:[#allocation3 + $0x8] sm:$0xf]
    %v42 = vld [vmem:[#allocation3 + $0xc] sm:$0xf]
    %v43 = vld [vmem:[#allocation3 + $0x10] sm:$0xf]
    %v44 = vld [vmem:[#allocation3 + $0x14] sm:$0xf]
    %v45 = vld [vmem:[#allocation3 + $0x18] sm:$0xf]
    %v46 = vld [vmem:[#allocation3 + $0x1c] sm:$0xf]
    %v47 = vld [vmem:[#allocation3 + $0x20] sm:$0xf]
    %v48 = vld [vmem:[#allocation3 + $0x24] sm:$0xf]
    %v49 = vld [vmem:[#allocation3 + $0x28] sm:$0xf]
    %v50 = vld [vmem:[#allocation3 + $0x2c] sm:$0xf]
    %v51 = vld [vmem:[#allocation3 + $0x30] sm:$0xf]
    %v52 = vld [vmem:[#allocation3 + $0x34] sm:$0xf]
    %v53 = vld [vmem:[#allocation3 + $0x38] sm:$0xf]
    %v54 = vld [vmem:[#allocation3 + $0x3c] sm:$0xf]
    %v57 = vunpack.c.l.b16 %v37
    %v58 = vunpack.c.l.b16 %v38
    %v59 = vpack.c.b16 %v58, %v57
    %v77 = vunpack.c.l.b16 %v39
    %v78 = vunpack.c.l.b16 %v40
    %v79 = vunpack.c.l.b16 %v41
    %v80 = vunpack.c.l.b16 %v42
    %v81 = vunpack.c.l.b16 %v43
    %v82 = vunpack.c.l.b16 %v44
    %v83 = vunpack.c.l.b16 %v45
    %v84 = vunpack.c.l.b16 %v46
    %v85 = vunpack.c.l.b16 %v47
    %v86 = vunpack.c.l.b16 %v48
    %v87 = vunpack.c.l.b16 %v49
    %v88 = vunpack.c.l.b16 %v50
    %v89 = vunpack.c.l.b16 %v51
    %v90 = vunpack.c.l.b16 %v52
    %v91 = vunpack.c.l.b16 %v53
    %v92 = vunpack.c.l.b16 %v54
    %v93 = vpack.c.b16 %v78, %v77
    %v94 = vpack.c.b16 %v80, %v79
    %v95 = vpack.c.b16 %v82, %v81
    %v96 = vpack.c.b16 %v84, %v83
    %v97 = vpack.c.b16 %v86, %v85
    %v98 = vpack.c.b16 %v88, %v87
    %v99 = vpack.c.b16 %v90, %v89
    %v100 = vpack.c.b16 %v92, %v91
    %109 = vmatprep.subr.bf16.mxu0 0
    %110 = vmatpush1.bf16.msra.mxu0 %v100
    %111 = vmatprep.subr.bf16.mxu0 0
    %112 = vmatpush1.bf16.msra.mxu0 %v99
    %113 = vmatprep.subr.bf16.mxu0 0
    %114 = vmatpush1.bf16.msra.mxu0 %v98
    %115 = vmatprep.subr.bf16.mxu0 0
    %116 = vmatpush1.bf16.msra.mxu0 %v97
    %117 = vmatprep.subr.bf16.mxu0 0
    %118 = vmatpush1.bf16.msra.mxu0 %v96
    %119 = vmatprep.subr.bf16.mxu0 0
    %120 = vmatpush1.bf16.msra.mxu0 %v95
    %121 = vmatprep.subr.bf16.mxu0 0
    %122 = vmatpush1.bf16.msra.mxu0 %v94
    %123 = vmatprep.subr.bf16.mxu0 0
    %124 = vmatpush1.bf16.msra.mxu0 %v93
    %125 = vmatprep.subr.bf16.mxu0 0
    %126 = vmatpush2.bf16.msra.mxu0 0
    %127 = vmatprep.subr.bf16.mxu0 0
    %128 = vmatpush2.bf16.msra.mxu0 0
    %129 = vmatprep.subr.bf16.mxu0 0
    %130 = vmatpush2.bf16.msra.mxu0 0
    %131 = vmatprep.subr.bf16.mxu0 0
    %132 = vmatpush2.bf16.msra.mxu0 0
    %133 = vmatprep.subr.bf16.mxu0 0
    %134 = vmatpush2.bf16.msra.mxu0 0
    %135 = vmatprep.subr.bf16.mxu0 0
    %136 = vmatpush2.bf16.msra.mxu0 0
    %137 = vmatprep.subr.bf16.mxu0 0
    %138 = vmatpush2.bf16.msra.mxu0 0
    %139 = vmatprep.subr.bf16.mxu0 0
    %140 = vmatpush2.bf16.msra.mxu0 0
    %141 = vmatprep.mubr.bf16.mxu0 0
    %142 = vmatmul.mubr.bf16.gmra.mxu0 %v59
    %v143 = vpop.f32.mrf.mxu0
    %v144 = vadd.f32 0.0, %v143
    %v145 = vpop.f32.mrf.mxu0
    %v146 = vpop.f32.mrf.mxu0
    %v147 = vadd.f32 0.0, %v146
    %v148 = vpop.f32.mrf.mxu0
    %149 = vdwg.mxu0
    %v150 = vadd.f32 %v35, %v144
    %v151 = vadd.f32 %v36, %v147
    %152 = vst [vmem:[#allocation2] sm:$0xff] %v150
    %153 = vst [vmem:[#allocation2 + $0x8] sm:$0xff] %v151
    // Predicated region
    $region22: #{code_embed_forward.1} parent=1 // pred_check
      %p154 = pneg %p29
    $region23: #{code_embed_forward.1} parent=1 // pred_check_branch
      %156 = sbr.rel (%p154) target = $region25
    $region24: #{code_embed_forward.1} parent=1 // pred_region
      %v157 = vld [vmem:[#allocation2] sm:$0xff]
      %v158 = vld [vmem:[#allocation2 + $0x8] sm:$0xff]
      %v159 = vld [vmem:[%s2] sm:$0x1]
      %v161 = vlaneseq
      %v162 = vshrl.u32 %v161, 7
      %v163 = vsub.s32 0, %v162
      %v164 = vrot.slane %v159, %v163
      %v166 = vadd.f32 %v157, %v164
      %v167 = vadd.f32 %v158, %v164
      %168 = vst [vmem:[%s3] sm:$0xff] %v166
      %169 = vst [vmem:[%s3 + $0x8] sm:$0xff] %v167
    $region25: #{code_embed_forward.1} parent=1 // pred_fallthru
      _
    // Predicated region
    $region26: #{code_embed_forward.1} parent=1 // pred_check
      _
    $region27: #{code_embed_forward.1} parent=1 // pred_check_branch
      %171 = sbr.rel (0) target = $region29
    $region28: #{code_embed_forward.1} parent=1 // pred_region
      _
    $region29: #{code_embed_forward.1} parent=1 // pred_fallthru
      _
    // Predicated region
    $region30: #{code_embed_forward.1} parent=1 // pred_check
      _
    $region31: #{code_embed_forward.1} parent=1 // pred_check_branch
      %173 = sbr.rel (0) target = $region33
    $region32: #{code_embed_forward.1} parent=1 // pred_region
      _
    $region33: #{code_embed_forward.1} parent=1 // pred_fallthru
      _
    %174 = vsyncpa [#allocation4], 1

</llo_original>
